<compile_context>
chip_gen: v7x
topology: tpu7x:2x2x1
jax: 0.10.0
libtpu: 0.0.40
codegen_flags: <defaults>
</compile_context>

<pallas_src>
import functools

import jax
import jax.numpy as jnp
from jax.experimental import pallas as pl
from jax.experimental.pallas import tpu as pltpu


LANES = 128
SUBLANES = 8
NSHARDS = 2            # leading parallel axis (v7x dual-TC; harmless elsewhere)
MAX_TILE_ROWS = 2048   # 2048 * 128 * 4B = 1 MiB per f32 input block


def _make_l1_sum_kernel(tile_r, scale_and_clamp):
    """Kernel: accumulate per-lane sums of |pred - gt| into an (8,128) block."""

    def kernel(pred_ref, gt_ref, out_ref):
        # out_ref is the (8,128) per-shard accumulator (resident across the
        # "arbitrary" reduction axis). Zero it on the first step of each shard.
        @pl.when(pl.program_id(1) == 0)
        def _():
            out_ref[...] = jnp.zeros_like(out_ref)

        p = pred_ref[...].astype(jnp.float32)
        g = gt_ref[...].astype(jnp.float32)
        if scale_and_clamp:
            p = jnp.clip(p * 255.0, 0.0, 255.0)
            g = g * 255.0
        d = jnp.abs(p - g)
        # (tile_r,128) -> (tile_r//8, 8, 128), sum over leading axis:
        # pure vreg adds on the VPU, no lane/sublane shuffles.
        d3 = d.reshape(tile_r // SUBLANES, SUBLANES, LANES)
        out_ref[...] += jnp.sum(d3, axis=0)

    return kernel


@functools.partial(jax.jit, static_argnames=("scale_and_clamp",))
def l1_loss_pallas(pred, gt, *, scale_and_clamp=False):
    """mean(|T(pred) - T(gt)|), T = clamp(.*255,0,255)/(.*255) if scale_and_clamp."""
    assert pred.shape == gt.shape, (pred.shape, gt.shape)
    n = pred.size
    assert n > 0

    p = pred.reshape(-1)
    g = gt.reshape(-1)

    rows = -(-n // LANES)
    rows_per_shard = -(-rows // NSHARDS)
    # Largest sublane-aligned tile <= MAX_TILE_ROWS that covers a shard.
    tile_r = min(MAX_TILE_ROWS,
                 ((rows_per_shard + SUBLANES - 1) // SUBLANES) * SUBLANES)
    steps = -(-rows_per_shard // tile_r)
    padded_rows = NSHARDS * steps * tile_r

    pad = padded_rows * LANES - n
    if pad:
        # Zero padding contributes 0 to |pred - gt| for both code paths
        # (clamp(0*255)=0, 0*255=0), so no masking is required.
        p = jnp.pad(p, (0, pad))
        g = jnp.pad(g, (0, pad))

    p2 = p.reshape(padded_rows, LANES)
    g2 = g.reshape(padded_rows, LANES)

    kernel = _make_l1_sum_kernel(tile_r, scale_and_clamp)

    partials = pl.pallas_call(
        kernel,
        out_shape=jax.ShapeDtypeStruct((NSHARDS, SUBLANES, LANES), jnp.float32),
        grid_spec=pltpu.PrefetchScalarGridSpec(
            num_scalar_prefetch=0,
            grid=(NSHARDS, steps),
            in_specs=[
                pl.BlockSpec((tile_r, LANES), lambda s, i: (s * steps + i, 0)),
                pl.BlockSpec((tile_r, LANES), lambda s, i: (s * steps + i, 0)),
            ],
            # Lane-dense per-shard accumulator; first dim squeezed in-kernel.
            out_specs=pl.BlockSpec((None, SUBLANES, LANES),
                                   lambda s, i: (s, 0, 0)),
        ),
        compiler_params=pltpu.CompilerParams(
            dimension_semantics=("parallel", "arbitrary"),
        ),
    )(p2, g2)

    # Single cross-lane reduce + mean outside the kernel.
    return jnp.sum(partials) / jnp.float32(n)


def l1_forward(inputs, outputs, mode="train", frame=1, use_depth=False):
    """Mirrors L1.forward. loss_dict values stay as jnp scalars (no host syncs)."""
    loss_dict = {}

    output_image = outputs["rgb"]          # (B, C, H, W)
    gt_image = inputs["rgb"][:, 2]         # (B, C, H, W)
    B = output_image.shape[0]
    if B != 1:
        raise ValueError("not implemented")
    action = inputs["action_name"][0]

    loss = l1_loss_pallas(output_image, gt_image, scale_and_clamp=True)
    loss_dict["{}/l1_{}".format(mode, action)] = loss
    loss_dict["{}/l1_mean".format(mode)] = loss

    if use_depth:
        output_depth = outputs["depth"]    # (B, 1, H, W)
        gt_depth = inputs["depth"][:, 2]   # (B, 1, H, W)
        loss = l1_loss_pallas(output_depth, gt_depth, scale_and_clamp=False)
        loss_dict["{}/l1_depth_{}".format(mode, action)] = loss
        loss_dict["{}/l1_depth_mean".format(mode)] = loss

    # torch.tensor(0).to(device)
    return jnp.zeros((), dtype=jnp.int32), loss_dict


if __name__ == "__main__":
    # B must be 1 (the original module raises otherwise).
    B, T, C, H, W = 1, 4, 4, 16, 16

    key = jax.random.PRNGKey(0)
    k1, k2, k3, k4 = jax.random.split(key, 4)

    rgb_gt = jax.random.uniform(k1, (B, T, C, H, W), dtype=jnp.float32)
    # Push some predictions outside [0,1] so the clamp path is exercised.
    rgb_pred = jax.random.uniform(k2, (B, C, H, W), dtype=jnp.float32) * 1.3 - 0.15
    depth_gt = jax.random.uniform(k3, (B, T, 1, H, W), dtype=jnp.float32)
    depth_pred = jax.random.uniform(k4, (B, 1, H, W), dtype=jnp.float32)

    inputs = {"rgb": rgb_gt, "depth": depth_gt, "action_name": ["pick_object"]}
    outputs = {"rgb": rgb_pred, "depth": depth_pred}

    zero, loss_dict = l1_forward(inputs, outputs, mode="train", use_depth=True)
    jax.block_until_ready(loss_dict["train/l1_mean"])
    jax.block_until_ready(loss_dict["train/l1_depth_mean"])

    # Reference check against plain JAX (torch.nn.L1Loss semantics).
    ref_rgb = jnp.mean(
        jnp.abs(jnp.clip(rgb_pred * 255.0, 0.0, 255.0) - rgb_gt[:, 2] * 255.0)
    )
    ref_depth = jnp.mean(jnp.abs(depth_pred - depth_gt[:, 2]))

    assert jnp.allclose(loss_dict["train/l1_mean"], ref_rgb,
                        rtol=1e-5, atol=1e-4), (loss_dict["train/l1_mean"], ref_rgb)
    assert jnp.allclose(loss_dict["train/l1_pick_object"], ref_rgb,
                        rtol=1e-5, atol=1e-4)
    assert jnp.allclose(loss_dict["train/l1_depth_mean"], ref_depth,
                        rtol=1e-5, atol=1e-6), (loss_dict["train/l1_depth_mean"], ref_depth)
    assert int(zero) == 0

    print("KERNEL_OK")
</pallas_src>

<mosaic_0001>
module attributes {stable_mosaic.version = 11 : i64} {
  func.func @kernel(%arg0: i32, %arg1: i32, %arg2: memref<8x128xf32, #tpu.memory_space<vmem>>, %arg3: memref<8x128xf32, #tpu.memory_space<vmem>>, %arg4: memref<1x8x128xf32, #tpu.memory_space<vmem>>) attributes {dimension_semantics = [#tpu.dimension_semantics<parallel>, #tpu.dimension_semantics<arbitrary>], iteration_bounds = array<i64: 2, 1>, scalar_prefetch = 0 : i64, scratch_operands = 0 : i64, tpu.core_type = #tpu.core_type<tc>, window_params = [{transform_indices = @transform_0, window_bounds = array<i64: 8, 128>}, {transform_indices = @transform_1, window_bounds = array<i64: 8, 128>}, {transform_indices = @transform_2, window_bounds = array<i64: 1, 8, 128>}]} {
    %c0_i32 = arith.constant 0 : i32
    %0 = arith.cmpi eq, %arg1, %c0_i32 : i32
    %1 = arith.extui %0 : i1 to i32
    %c0_i32_0 = arith.constant 0 : i32
    %2 = arith.cmpi ne, %1, %c0_i32_0 : i32
    scf.if %2 {
      %cst_14 = arith.constant 0.000000e+00 : f32
      %23 = vector.broadcast %cst_14 : f32 to vector<8x128xf32>
      %c0_15 = arith.constant 0 : index
      %c0_16 = arith.constant 0 : index
      %c0_17 = arith.constant 0 : index
      %24 = vector.load %arg4[%c0_15, %c0_16, %c0_17] : memref<1x8x128xf32, #tpu.memory_space<vmem>>, vector<1x8x128xf32>
      %25 = vector.shape_cast %24 : vector<1x8x128xf32> to vector<8x128xf32>
      %26 = vector.shape_cast %23 : vector<8x128xf32> to vector<1x8x128xf32>
      tpu.vector_store %arg4[%c0_15, %c0_16, %c0_17], %26 {strides = array<i32>} : memref<1x8x128xf32, #tpu.memory_space<vmem>>, vector<1x8x128xf32>,
    } else {
    }
    %c0 = arith.constant 0 : index
    %c0_1 = arith.constant 0 : index
    %3 = vector.load %arg2[%c0, %c0_1] : memref<8x128xf32, #tpu.memory_space<vmem>>, vector<8x128xf32>
    %c0_2 = arith.constant 0 : index
    %c0_3 = arith.constant 0 : index
    %4 = vector.load %arg3[%c0_2, %c0_3] : memref<8x128xf32, #tpu.memory_space<vmem>>, vector<8x128xf32>
    %cst = arith.constant 2.550000e+02 : f32
    %5 = vector.broadcast %cst : f32 to vector<8x128xf32>
    %6 = arith.mulf %3, %5 : vector<8x128xf32>
    %cst_4 = arith.constant 0.000000e+00 : f32
    %cst_5 = arith.constant 2.550000e+02 : f32
    %7 = vector.broadcast %cst_4 : f32 to vector<8x128xf32>
    %8 = arith.maximumf %7, %6 : vector<8x128xf32>
    %9 = vector.broadcast %cst_5 : f32 to vector<8x128xf32>
    %10 = arith.minimumf %9, %8 : vector<8x128xf32>
    %cst_6 = arith.constant 2.550000e+02 : f32
    %11 = vector.broadcast %cst_6 : f32 to vector<8x128xf32>
    %12 = arith.mulf %4, %11 : vector<8x128xf32>
    %13 = arith.subf %10, %12 : vector<8x128xf32>
    %14 = math.absf %13 : vector<8x128xf32>
    %15 = vector.shape_cast %14 : vector<8x128xf32> to vector<1x8x128xf32>
    %c0_7 = arith.constant 0 : index
    %c0_8 = arith.constant 0 : index
    %c0_9 = arith.constant 0 : index
    %16 = vector.load %arg4[%c0_7, %c0_8, %c0_9] : memref<1x8x128xf32, #tpu.memory_space<vmem>>, vector<1x8x128xf32>
    %17 = vector.shape_cast %16 : vector<1x8x128xf32> to vector<8x128xf32>
    %cst_10 = arith.constant dense<0.000000e+00> : vector<8x128xf32>
    %18 = vector.multi_reduction <add>, %15, %cst_10 [0] : vector<1x8x128xf32> to vector<8x128xf32>
    %19 = arith.addf %17, %18 : vector<8x128xf32>
    %c0_11 = arith.constant 0 : index
    %c0_12 = arith.constant 0 : index
    %c0_13 = arith.constant 0 : index
    %20 = vector.load %arg4[%c0_11, %c0_12, %c0_13] : memref<1x8x128xf32, #tpu.memory_space<vmem>>, vector<1x8x128xf32>
    %21 = vector.shape_cast %20 : vector<1x8x128xf32> to vector<8x128xf32>
    %22 = vector.shape_cast %19 : vector<8x128xf32> to vector<1x8x128xf32>
    tpu.vector_store %arg4[%c0_11, %c0_12, %c0_13], %22 {strides = array<i32>} : memref<1x8x128xf32, #tpu.memory_space<vmem>>, vector<1x8x128xf32>,
    return
  }
  func.func @transform_0(%arg0: i32, %arg1: i32) -> (i32, i32) {
    %c1_i32 = arith.constant 1 : i32
    %0 = arith.muli %arg0, %c1_i32 : i32
    %1 = arith.addi %0, %arg1 : i32
    %c0_i32 = arith.constant 0 : i32
    %c0_i32_0 = arith.constant 0 : i32
    return %1, %c0_i32 : i32, i32
  }
  func.func @transform_1(%arg0: i32, %arg1: i32) -> (i32, i32) {
    %c1_i32 = arith.constant 1 : i32
    %0 = arith.muli %arg0, %c1_i32 : i32
    %1 = arith.addi %0, %arg1 : i32
    %c0_i32 = arith.constant 0 : i32
    %c0_i32_0 = arith.constant 0 : i32
    return %1, %c0_i32 : i32, i32
  }
  func.func @transform_2(%arg0: i32, %arg1: i32) -> (i32, i32, i32) {
    %c0_i32 = arith.constant 0 : i32
    %c0_i32_0 = arith.constant 0 : i32
    %c0_i32_1 = arith.constant 0 : i32
    return %arg0, %c0_i32, %c0_i32_0 : i32, i32, i32
  }
}

</mosaic_0001>

<llo_original>
// kernel: l1_loss_pallas.1
$region0: #{l1_loss_pallas.1}
  #allocation0 [shape = 'u32[]', space=smem, size = 0x4, offset = 0x4, fixed_abs, tag = 'smem constant byte address 0x4 - core index']
  #allocation1 [shape = 'u32[144,128]{1,0:T(1,128)}', space=vmem, size = 0x12000, scoped, tag = 'internal scratch']
  %s0 = inlined_call_operand.vmem [shape: f32[16,128], index: 0, kind: input, shape index: {}]
  %s1 = inlined_call_operand.vmem [shape: f32[16,128], index: 1, kind: input, shape index: {}]
  %s2 = inlined_call_operand.vmem [shape: f32[2,8,128], index: 2, kind: output, shape index: {}]
  %s3 = sld [smem:[#allocation0]]
  $region45: #{l1_loss_pallas.1} parent=0
    _
  %s5 = ssub.s32 1, %s3
  %s6 = scalar_select 0, %s5, %s3
  loop: start=0, step=1, limit=4
  $region2: #{l1_loss_pallas.1} parent=0 // loop_pre_header
    _
  $region3: #{l1_loss_pallas.1} parent=0 // loop_header
    %s8 = sphi 0, %s12
    %p9 = scmp.ge.s32.totalorder %s8, 4
    %s15 = sphi 0, %s27
    %s16 = sphi 0, %s23
    %s17 = sphi 0, %s15
    %s18 = sphi 0, %s16
    %s19 = sphi 0, %s17
    %s20 = sphi 0, %s18
    %s32 = sphi 0, %s34
    %s35 = sphi 0, %s32
    %s36 = sphi 0, %s35
    %s52 = sphi 0, %s36
    %s60 = sphi 0, %s62
    %s63 = sphi 0, %s60
    %s64 = sphi 0, %s63
    %s80 = sphi 0, %s64
    %s86 = sphi 0, %s88
    %s89 = sphi 0, %s86
    %s90 = sphi 0, %s89
    %s106 = sphi 0, %s90
  $region4: #{l1_loss_pallas.1} parent=0 // loop_header_branch
    %11 = sbr.rel (%p9) target = $region8
  $region5: #{l1_loss_pallas.1} parent=0 // loop_body
    %s13 = ssub.s32 %s8, 1
    %s14 = ssub.s32 %s8, 2
    %s21 = sadd.s32 1, %s16
    %p22 = scmp.ge.s32.totalorder %s21, 1
    %s23 = scalar_select %p22, 0, %s21
    %s24 = sadd.s32 1, %s15
    %s25 = scalar_select %p22, %s24, %s15
    %p26 = scmp.ge.s32.totalorder %s25, 2
    %s27 = scalar_select %p26, 0, %s25
    %s28 = sadd.s32 %s15, %s16
    %s29 = sadd.s32 %s27, %s23
    %s30 = ssub.s32 %s28, %s29
    %p31 = scmp.eq.s32.totalorder %s30, 0
    %s33 = sadd.s32 %s32, 1
    %s34 = scalar_select %p31, %s32, %s33
    %p37 = pneg %p31
    %p38 = scmp.eq.s32.totalorder %s8, 1
    %p39 = por %p37, %p38
    %p40 = scmp.ne.s32.totalorder %s32, %s35
    %p41 = scmp.eq.s32.totalorder %s8, 0
    %p42 = por %p40, %p41
    %p43 = scmp.ne.s32.totalorder %s32, %s35
    %p44 = scmp.eq.s32.totalorder %s13, 1
    %p45 = por %p43, %p44
    %p46 = scmp.ne.s32.totalorder %s35, %s36
    %p47 = scmp.eq.s32.totalorder %s13, 0
    %p48 = por %p46, %p47
    %p49 = scmp.ne.s32.totalorder %s35, %s36
    %p50 = scmp.eq.s32.totalorder %s14, 1
    %p51 = por %p49, %p50
    %p53 = scmp.ne.s32.totalorder %s36, %s52
    %p54 = scmp.eq.s32.totalorder %s14, 0
    %p55 = por %p53, %p54
    %s56 = sadd.s32 %s15, %s16
    %s57 = sadd.s32 %s27, %s23
    %s58 = ssub.s32 %s56, %s57
    %p59 = scmp.eq.s32.totalorder %s58, 0
    %s61 = sadd.s32 %s60, 1
    %s62 = scalar_select %p59, %s60, %s61
    %p65 = pneg %p59
    %p66 = scmp.eq.s32.totalorder %s8, 1
    %p67 = por %p65, %p66
    %p68 = scmp.ne.s32.totalorder %s60, %s63
    %p69 = scmp.eq.s32.totalorder %s8, 0
    %p70 = por %p68, %p69
    %p71 = scmp.ne.s32.totalorder %s60, %s63
    %p72 = scmp.eq.s32.totalorder %s13, 1
    %p73 = por %p71, %p72
    %p74 = scmp.ne.s32.totalorder %s63, %s64
    %p75 = scmp.eq.s32.totalorder %s13, 0
    %p76 = por %p74, %p75
    %p77 = scmp.ne.s32.totalorder %s63, %s64
    %p78 = scmp.eq.s32.totalorder %s14, 1
    %p79 = por %p77, %p78
    %p81 = scmp.ne.s32.totalorder %s64, %s80
    %p82 = scmp.eq.s32.totalorder %s14, 0
    %p83 = por %p81, %p82
    %s84 = ssub.s32 %s15, %s27
    %p85 = scmp.eq.s32.totalorder %s84, 0
    %s87 = sadd.s32 %s86, 1
    %s88 = scalar_select %p85, %s86, %s87
    %p91 = pneg %p85
    %p92 = scmp.eq.s32.totalorder %s8, 1
    %p93 = por %p91, %p92
    %p94 = scmp.ne.s32.totalorder %s86, %s89
    %p95 = scmp.eq.s32.totalorder %s8, 0
    %p96 = por %p94, %p95
    %p97 = scmp.ne.s32.totalorder %s86, %s89
    %p98 = scmp.eq.s32.totalorder %s13, 1
    %p99 = por %p97, %p98
    %p100 = scmp.ne.s32.totalorder %s89, %s90
    %p101 = scmp.eq.s32.totalorder %s13, 0
    %p102 = por %p100, %p101
    %p103 = scmp.ne.s32.totalorder %s89, %s90
    %p104 = scmp.eq.s32.totalorder %s14, 1
    %p105 = por %p103, %p104
    %p107 = scmp.ne.s32.totalorder %s90, %s106
    %p108 = scmp.eq.s32.totalorder %s14, 0
    %p109 = por %p107, %p108
    %p110 = scmp.le.s32.totalorder 1, %s8
    %p111 = scmp.lt.s32.totalorder %s8, 3
    %p112 = pnand %p110, %p111
    %p113 = pneg %p112
    // Predicated region
    $region9: #{l1_loss_pallas.1} parent=5 // pred_check
      _
    $region10: #{l1_loss_pallas.1} parent=5 // pred_check_branch
      %115 = sbr.rel (%p112) target = $region12
    $region11: #{l1_loss_pallas.1} parent=5 // pred_region
      %s116 = ssub.s32 %s8, 1
    $region12: #{l1_loss_pallas.1} parent=5 // pred_fallthru
      _
    %p117 = scmp.lt.s32.totalorder %s8, 2
    // Predicated region
    $region13: #{l1_loss_pallas.1} parent=5 // pred_check
      %p118 = pneg %p117
    $region14: #{l1_loss_pallas.1} parent=5 // pred_check_branch
      %120 = sbr.rel (%p118) target = $region16
    $region15: #{l1_loss_pallas.1} parent=5 // pred_region
      // Predicated region
      $region17: #{l1_loss_pallas.1} parent=15 // pred_check
        %p121 = pneg %p42
      $region18: #{l1_loss_pallas.1} parent=15 // pred_check_branch
        %123 = sbr.rel (%p121) target = $region20
      $region19: #{l1_loss_pallas.1} parent=15 // pred_region
        %s124 = sadd.s32 %s15, %s16
        %p125 = scmp.lt.s32.totalorder %s124, 1
        %s126 = scalar_select %p125, %s124, 1
        %s127 = smul.addr %s126, 8
        %s128 = scalar_lea.vmem %s0, %s127
        %s129 = sadd.s32 %s15, %s16
      $region20: #{l1_loss_pallas.1} parent=15 // pred_fallthru
        _
      // Predicated region
      $region21: #{l1_loss_pallas.1} parent=15 // pred_check
        %p130 = pneg %p70
      $region22: #{l1_loss_pallas.1} parent=15 // pred_check_branch
        %132 = sbr.rel (%p130) target = $region24
      $region23: #{l1_loss_pallas.1} parent=15 // pred_region
        %s133 = sadd.s32 %s15, %s16
        %p134 = scmp.lt.s32.totalorder %s133, 1
        %s135 = scalar_select %p134, %s133, 1
        %s136 = smul.addr %s135, 8
        %s137 = scalar_lea.vmem %s1, %s136
        %s138 = sadd.s32 %s15, %s16
      $region24: #{l1_loss_pallas.1} parent=15 // pred_fallthru
        _
    $region16: #{l1_loss_pallas.1} parent=5 // pred_fallthru
      _
    %p139 = scmp.le.s32.totalorder 1, %s8
    %p140 = scmp.lt.s32.totalorder %s8, 3
    %p141 = pnand %p139, %p140
    %p142 = pneg %p141
    // Predicated region
    $region25: #{l1_loss_pallas.1} parent=5 // pred_check
      _
    $region26: #{l1_loss_pallas.1} parent=5 // pred_check_branch
      %144 = sbr.rel (%p141) target = $region28
    $region27: #{l1_loss_pallas.1} parent=5 // pred_region
      %s145 = ssub.s32 %s8, 1
      %s146 = sadd.s32 %s17, %s18
      %p147 = scmp.lt.s32.totalorder %s146, 1
      %s148 = scalar_select %p147, %s146, 1
      %s149 = smul.addr %s148, 8
      %s150 = scalar_lea.vmem %s0, %s149
      %p151 = pneg %p48
      %p152 = pneg %p45
      %s153 = sadd.s32 %s17, %s18
      %p154 = scmp.lt.s32.totalorder %s153, 1
      %s155 = scalar_select %p154, %s153, 1
      %s156 = smul.addr %s155, 8
      %s157 = scalar_lea.vmem %s1, %s156
      %p158 = pneg %p76
      %p159 = pneg %p73
      %p160 = pneg %p102
      %p161 = pneg %p99
      %p162 = scmp.lt.s32.totalorder %s17, 1
      %s163 = scalar_select %p162, %s17, 1
      %s164 = smul.addr %s163, 8
      %s165 = scalar_lea.vmem %s2, %s164
      %s166 = sadd.s32 %s17, %s18
      %p167 = scmp.lt.s32.totalorder %s166, 1
      %s168 = scalar_select %p167, %s166, 1
      %s169 = smul.addr %s168, 8
      %s170 = scalar_lea.vmem %s0, %s169
      %s171 = sadd.s32 %s17, %s18
      %s172 = sadd.s32 %s17, %s18
      %p173 = scmp.lt.s32.totalorder %s172, 1
      %s174 = scalar_select %p173, %s172, 1
      %s175 = smul.addr %s174, 8
      %s176 = scalar_lea.vmem %s1, %s175
      %s177 = sadd.s32 %s17, %s18
      %p178 = scmp.lt.s32.totalorder %s17, 1
      %s179 = scalar_select %p178, %s17, 1
      %s180 = smul.addr %s179, 8
      %s181 = scalar_lea.vmem %s2, %s180
      %p182 = scmp.eq.s32.totalorder %s18, 0
      // Predicated region
      $region29: #{l1_loss_pallas.1} parent=27 // pred_check
        %p183 = pneg %p182
      $region30: #{l1_loss_pallas.1} parent=27 // pred_check_branch
        %185 = sbr.rel (%p183) target = $region32
      $region31: #{l1_loss_pallas.1} parent=27 // pred_region
        %186 = vst [vmem:[%s181] sm:$0xff] 0.0
      $region32: #{l1_loss_pallas.1} parent=27 // pred_fallthru
        _
      %v187 = vld [vmem:[%s170] sm:$0xff]
      %v188 = vld [vmem:[%s176] sm:$0xff]
      %v189 = vmul.f32 %v187, 255.0
      %v190 = vmax.f32 %v189, 0.0
      %v191 = vmin.f32 %v190, 255.0
      %v192 = vmul.f32 %v188, 255.0
      %v193 = vsub.f32 %v191, %v192
      %v194 = vand.u32 2147483647, %v193
      %v195 = vld [vmem:[%s181] sm:$0xff]
      %v196 = vadd.f32 %v194, 0.0
      %v197 = vadd.f32 %v195, %v196
      %198 = vst [vmem:[%s181] sm:$0xff] %v197
      %p199 = scmp.lt.s32.totalorder %s17, 1
      %s200 = scalar_select %p199, %s17, 1
      %s201 = smul.addr %s200, 8
      %s202 = scalar_lea.vmem %s2, %s201
      // Predicated region
      $region33: #{l1_loss_pallas.1} parent=27 // pred_check
        %p203 = pneg %p99
      $region34: #{l1_loss_pallas.1} parent=27 // pred_check_branch
        %205 = sbr.rel (%p203) target = $region36
      $region35: #{l1_loss_pallas.1} parent=27 // pred_region
        _
      $region36: #{l1_loss_pallas.1} parent=27 // pred_fallthru
        _
    $region28: #{l1_loss_pallas.1} parent=5 // pred_fallthru
      _
    %p206 = scmp.le.s32.totalorder 2, %s8
    // Predicated region
    $region37: #{l1_loss_pallas.1} parent=5 // pred_check
      %p207 = pneg %p206
    $region38: #{l1_loss_pallas.1} parent=5 // pred_check_branch
      %209 = sbr.rel (%p207) target = $region40
    $region39: #{l1_loss_pallas.1} parent=5 // pred_region
      %s210 = ssub.s32 %s8, 2
      // Predicated region
      $region41: #{l1_loss_pallas.1} parent=39 // pred_check
        %p211 = pneg %p105
      $region42: #{l1_loss_pallas.1} parent=39 // pred_check_branch
        %213 = sbr.rel (%p211) target = $region44
      $region43: #{l1_loss_pallas.1} parent=39 // pred_region
        %p214 = scmp.lt.s32.totalorder %s19, 1
        %s215 = scalar_select %p214, %s19, 1
        %s216 = smul.addr %s215, 8
        %s217 = scalar_lea.vmem %s2, %s216
      $region44: #{l1_loss_pallas.1} parent=39 // pred_fallthru
        _
    $region40: #{l1_loss_pallas.1} parent=5 // pred_fallthru
      _
  $region6: #{l1_loss_pallas.1} parent=0 // loop_footer
    %s12 = sadd.s32 1, %s8
  $region7: #{l1_loss_pallas.1} parent=0 // loop_footer_branch
    %7 = sbr.rel target = $region3
  $region8: #{l1_loss_pallas.1} parent=0 // loop_exit
    _

</llo_original>
